<compile_context>
chip_gen: v5e
topology: v5e:2x2
jax: 0.10.0
libtpu: 0.0.40
codegen_flags: <defaults>
</compile_context>

<pallas_src>
import functools

import jax
import jax.numpy as jnp
from jax.experimental import pallas as pl
from jax.experimental.pallas import tpu as pltpu

NEG_SLOPE = 0.01  # nn.LeakyReLU default
BN_EPS = 1e-5     # nn.BatchNorm1d default

LANE = 128
# ~2 MiB of bf16 x per grid step at d_in=32; keeps total VMEM (x dbl-buf + activations
# + out dbl-buf) around 10-12 MiB, inside every chip's default scoped-VMEM budget.
_DEFAULT_TILE_CAP = 32768


def _leaky_relu(x):
    return jnp.where(x >= 0, x, NEG_SLOPE * x)


def mlp_kernel(x_ref,
               w1_ref, b1_ref,
               w2_ref, b2_ref,
               w3_ref, b3_ref,
               o_ref):
    # Feature-major: x tile (d_in, tb); weights (out, in); biases (out, 1).
    # layer 0: folded (Linear + BN) -> LeakyReLU   (Dropout = identity in eval mode)
    h = jnp.dot(w1_ref[...], x_ref[...], preferred_element_type=jnp.float32) + b1_ref[...]
    h = _leaky_relu(h)

    # layer 1
    h = jnp.dot(w2_ref[...], h.astype(w2_ref.dtype),
                preferred_element_type=jnp.float32) + b2_ref[...]
    h = _leaky_relu(h)

    # final layer + sigmoid (lane-dense (d_out, tb) output, stored as bf16)
    y = jnp.dot(w3_ref[...], h.astype(w3_ref.dtype),
                preferred_element_type=jnp.float32) + b3_ref[...]
    o_ref[...] = jax.nn.sigmoid(y).astype(o_ref.dtype)


def _pick_batch_tile(n, cap=_DEFAULT_TILE_CAP):
    """Lanes per grid step: multiple of 128, <= cap, and >= 2 grid steps when N is large
    (so dimension_semantics=("parallel",) can use both v7x TensorCores)."""
    if n <= 2 * LANE:
        return LANE
    min_steps = max(2, pl.cdiv(n, cap))
    tb = pl.cdiv(pl.cdiv(n, min_steps), LANE) * LANE
    return max(LANE, min(tb, cap))


def _mlp_forward_t(x_t, packed, batch_tile=None):
    """Core feature-major forward: x_t (d_in, N) -> (d_out, N) bf16."""
    d_in, n = x_t.shape
    w1, b1 = packed["w1"], packed["b1"]
    w2, b2 = packed["w2"], packed["b2"]
    w3, b3 = packed["w3"], packed["b3"]
    d_out = w3.shape[0]
    assert w1.shape[1] == d_in

    x_t = x_t.astype(w1.dtype)  # bf16 on the dominant HBM read

    tb = _pick_batch_tile(n) if batch_tile is None else batch_tile
    assert tb % LANE == 0, "batch_tile must be a multiple of 128 lanes"
    n_pad = pl.cdiv(n, tb) * tb
    if n_pad != n:
        x_t = jnp.pad(x_t, ((0, 0), (0, n_pad - n)))
    grid = (n_pad // tb,)

    # Weights/biases: full-array blocks with constant index map -> VMEM-resident.
    full = lambda arr: pl.BlockSpec(arr.shape, lambda i: (0, 0))

    out = pl.pallas_call(
        mlp_kernel,
        out_shape=jax.ShapeDtypeStruct((d_out, n_pad), jnp.bfloat16),
        grid_spec=pltpu.PrefetchScalarGridSpec(
            num_scalar_prefetch=0,
            grid=grid,
            in_specs=[
                pl.BlockSpec((d_in, tb), lambda i: (0, i)),   # lane-dense x tile (dbl-buffered)
                full(w1), full(b1),
                full(w2), full(b2),
                full(w3), full(b3),
            ],
            out_specs=pl.BlockSpec((d_out, tb), lambda i: (0, i)),
        ),
        compiler_params=pltpu.CompilerParams(
            dimension_semantics=("parallel",)),
    )(x_t, w1, b1, w2, b2, w3, b3)
    return out[:, :n]


@functools.partial(jax.jit, static_argnames=("batch_tile",))
def mlp_forward_t(x_t, packed, batch_tile=None):
    """Feature-major entry point (preferred for throughput): (d_in, N) -> (d_out, N)."""
    return _mlp_forward_t(x_t, packed, batch_tile)


@functools.partial(jax.jit, static_argnames=("batch_tile",))
def mlp_forward(x, packed, batch_tile=None):
    """PyTorch-shaped entry: x (N, d_in) -> (N, d_out).  Transposes are layout plumbing."""
    return _mlp_forward_t(x.T, packed, batch_tile).T


def init_raw_params(key, input_dim, output_dim, L=2):
    """Deterministic synthetic parameters matching the PyTorch module (raw, unfolded).
    Weights are PyTorch-native (out, in); biases / BN params are (out, 1)."""
    assert L == 2, "this script instantiates the default L=2 configuration"
    dims = [input_dim // (2 ** i) for i in range(L + 1)]   # e.g. 32, 16, 8
    keys = jax.random.split(key, 16)
    k = iter(keys)

    def linear(din, dout):
        w = jax.random.normal(next(k), (dout, din), jnp.float32) * (1.0 / jnp.sqrt(din))
        b = jax.random.normal(next(k), (dout, 1), jnp.float32) * 0.1
        return w, b

    def bn(dout):
        gamma = 1.0 + 0.1 * jax.random.normal(next(k), (dout, 1), jnp.float32)
        beta = 0.1 * jax.random.normal(next(k), (dout, 1), jnp.float32)
        mean = 0.05 * jax.random.normal(next(k), (dout, 1), jnp.float32)
        var = 1.0 + 0.1 * jax.random.uniform(next(k), (dout, 1), jnp.float32)
        return gamma, beta, mean, var

    w1, b1 = linear(dims[0], dims[1]); g1, be1, m1, v1 = bn(dims[1])
    w2, b2 = linear(dims[1], dims[2]); g2, be2, m2, v2 = bn(dims[2])
    w3, b3 = linear(dims[2], output_dim)
    return dict(w1=w1, b1=b1, g1=g1, be1=be1, m1=m1, v1=v1,
                w2=w2, b2=b2, g2=g2, be2=be2, m2=m2, v2=v2,
                w3=w3, b3=b3)


def pack_params(raw, compute_dtype=jnp.bfloat16):
    """Fold eval-mode BN into the Linear params; weights -> bf16, biases stay f32."""
    def fold(w, b, gamma, beta, mean, var):
        scale = gamma / jnp.sqrt(var + BN_EPS)          # (dout, 1)
        return w * scale, b * scale + (beta - mean * scale)

    w1f, b1f = fold(raw["w1"], raw["b1"], raw["g1"], raw["be1"], raw["m1"], raw["v1"])
    w2f, b2f = fold(raw["w2"], raw["b2"], raw["g2"], raw["be2"], raw["m2"], raw["v2"])
    return dict(
        w1=w1f.astype(compute_dtype), b1=b1f.astype(jnp.float32),
        w2=w2f.astype(compute_dtype), b2=b2f.astype(jnp.float32),
        w3=raw["w3"].astype(compute_dtype), b3=raw["b3"].astype(jnp.float32),
    )


def mlp_reference_raw(x, raw):
    """Pure-JAX f32 reference exactly mirroring the PyTorch module (eval mode). x: (N, d_in)."""
    def layer(h, w, b, gamma, beta, mean, var):
        h = h @ w.T + b[:, 0]
        h = (h - mean[:, 0]) / jnp.sqrt(var[:, 0] + BN_EPS) * gamma[:, 0] + beta[:, 0]
        return jnp.where(h >= 0, h, NEG_SLOPE * h)
    h = layer(x, raw["w1"], raw["b1"], raw["g1"], raw["be1"], raw["m1"], raw["v1"])
    h = layer(h, raw["w2"], raw["b2"], raw["g2"], raw["be2"], raw["m2"], raw["v2"])
    return jax.nn.sigmoid(h @ raw["w3"].T + raw["b3"][:, 0])


def mlp_reference_packed(x, p):
    """Pure-JAX reference with the same math as the kernel (folded params, bf16 in, f32 acc)."""
    def mm(w, a):
        return jnp.dot(w, a, preferred_element_type=jnp.float32)
    xt = x.T.astype(p["w1"].dtype)
    h = _leaky_relu(mm(p["w1"], xt) + p["b1"])
    h = _leaky_relu(mm(p["w2"], h.astype(p["w2"].dtype)) + p["b2"])
    y = jax.nn.sigmoid(mm(p["w3"], h.astype(p["w3"].dtype)) + p["b3"])
    return y.T


if __name__ == "__main__":
    key = jax.random.PRNGKey(0)
    k_x, k_p, k_big = jax.random.split(key, 3)

    input_dim, output_dim = 32, 4
    raw = init_raw_params(k_p, input_dim, output_dim, L=2)
    packed = pack_params(raw)

    # --- small shape consistent with the module ---
    batch = 8
    x = jax.random.normal(k_x, (batch, input_dim), jnp.float32)
    x_bf16 = x.astype(jnp.bfloat16)

    y = jax.block_until_ready(mlp_forward(x_bf16, packed))
    assert y.shape == (batch, output_dim)
    # strict check vs a reference doing the same folded/bf16 math (bf16 output rounding)
    assert jnp.allclose(y.astype(jnp.float32), mlp_reference_packed(x_bf16, packed),
                        atol=1e-2, rtol=1e-2)
    # loose check vs the exact f32 unfused PyTorch-equivalent forward
    assert jnp.allclose(y.astype(jnp.float32), mlp_reference_raw(x, raw),
                        atol=4e-2, rtol=4e-2)

    # --- larger, non-tile-multiple batch: exercises padding + multi-step grid (2 steps) ---
    n_big = 5000
    xb = jax.random.normal(k_big, (n_big, input_dim), jnp.float32).astype(jnp.bfloat16)
    yb = jax.block_until_ready(mlp_forward(xb, packed))
    assert yb.shape == (n_big, output_dim)
    assert jnp.allclose(yb.astype(jnp.float32), mlp_reference_packed(xb, packed),
                        atol=1e-2, rtol=1e-2)

    # feature-major entry point (no wrapper transposes) gives identical results
    yt = jax.block_until_ready(mlp_forward_t(xb.T, packed))
    assert jnp.allclose(yt.T.astype(jnp.float32), yb.astype(jnp.float32), atol=1e-6)

    print("KERNEL_OK")
</pallas_src>

<mosaic_0001>
module attributes {stable_mosaic.version = 11 : i64} {
  func.func @mlp_kernel(%arg0: i32, %arg1: memref<32x128xbf16, #tpu.memory_space<vmem>>, %arg2: memref<16x32xbf16, #tpu.memory_space<vmem>>, %arg3: memref<16x1xf32, #tpu.memory_space<vmem>>, %arg4: memref<8x16xbf16, #tpu.memory_space<vmem>>, %arg5: memref<8x1xf32, #tpu.memory_space<vmem>>, %arg6: memref<4x8xbf16, #tpu.memory_space<vmem>>, %arg7: memref<4x1xf32, #tpu.memory_space<vmem>>, %arg8: memref<4x128xbf16, #tpu.memory_space<vmem>>) attributes {dimension_semantics = [#tpu.dimension_semantics<parallel>], iteration_bounds = array<i64: 1>, scalar_prefetch = 0 : i64, scratch_operands = 0 : i64, tpu.core_type = #tpu.core_type<tc>, window_params = [{transform_indices = @transform_0, window_bounds = array<i64: 32, 128>}, {pipeline_mode = #tpu.pipeline_mode<synchronous>, transform_indices = @transform_1, window_bounds = array<i64: 16, 32>}, {pipeline_mode = #tpu.pipeline_mode<synchronous>, transform_indices = @transform_2, window_bounds = array<i64: 16, 1>}, {pipeline_mode = #tpu.pipeline_mode<synchronous>, transform_indices = @transform_3, window_bounds = array<i64: 8, 16>}, {pipeline_mode = #tpu.pipeline_mode<synchronous>, transform_indices = @transform_4, window_bounds = array<i64: 8, 1>}, {pipeline_mode = #tpu.pipeline_mode<synchronous>, transform_indices = @transform_5, window_bounds = array<i64: 4, 8>}, {pipeline_mode = #tpu.pipeline_mode<synchronous>, transform_indices = @transform_6, window_bounds = array<i64: 4, 1>}, {transform_indices = @transform_7, window_bounds = array<i64: 4, 128>}]} {
    %c0 = arith.constant 0 : index
    %c0_0 = arith.constant 0 : index
    %0 = vector.load %arg2[%c0, %c0_0] : memref<16x32xbf16, #tpu.memory_space<vmem>>, vector<16x32xbf16>
    %c0_1 = arith.constant 0 : index
    %c0_2 = arith.constant 0 : index
    %1 = vector.load %arg1[%c0_1, %c0_2] : memref<32x128xbf16, #tpu.memory_space<vmem>>, vector<32x128xbf16>
    %cst = arith.constant dense<0.000000e+00> : vector<16x128xf32>
    %2 = tpu.matmul %0, %1, %cst {dimension_numbers = #tpu.dot_dimension_numbers<[1], [0], [0], [1], [0, 0, 1, 1], [], []>} : vector<16x32xbf16>, vector<32x128xbf16>, vector<16x128xf32> -> vector<16x128xf32>
    %c0_3 = arith.constant 0 : index
    %c0_4 = arith.constant 0 : index
    %3 = vector.load %arg3[%c0_3, %c0_4] : memref<16x1xf32, #tpu.memory_space<vmem>>, vector<16x1xf32>
    %4 = vector.broadcast %3 : vector<16x1xf32> to vector<16x128xf32>
    %5 = arith.addf %2, %4 : vector<16x128xf32>
    %cst_5 = arith.constant 0.000000e+00 : f32
    %6 = vector.broadcast %cst_5 : f32 to vector<16x128xf32>
    %7 = arith.cmpf oge, %5, %6 : vector<16x128xf32>
    %cst_6 = arith.constant 0.00999999977 : f32
    %8 = vector.broadcast %cst_6 : f32 to vector<16x128xf32>
    %9 = arith.mulf %8, %5 : vector<16x128xf32>
    %10 = arith.select %7, %5, %9 : vector<16x128xi1>, vector<16x128xf32>
    %c0_7 = arith.constant 0 : index
    %c0_8 = arith.constant 0 : index
    %11 = vector.load %arg4[%c0_7, %c0_8] : memref<8x16xbf16, #tpu.memory_space<vmem>>, vector<8x16xbf16>
    %12 = arith.truncf %10 : vector<16x128xf32> to vector<16x128xbf16>
    %cst_9 = arith.constant dense<0.000000e+00> : vector<8x128xf32>
    %13 = tpu.matmul %11, %12, %cst_9 {dimension_numbers = #tpu.dot_dimension_numbers<[1], [0], [0], [1], [0, 0, 1, 1], [], []>} : vector<8x16xbf16>, vector<16x128xbf16>, vector<8x128xf32> -> vector<8x128xf32>
    %c0_10 = arith.constant 0 : index
    %c0_11 = arith.constant 0 : index
    %14 = vector.load %arg5[%c0_10, %c0_11] : memref<8x1xf32, #tpu.memory_space<vmem>>, vector<8x1xf32>
    %15 = vector.broadcast %14 : vector<8x1xf32> to vector<8x128xf32>
    %16 = arith.addf %13, %15 : vector<8x128xf32>
    %cst_12 = arith.constant 0.000000e+00 : f32
    %17 = vector.broadcast %cst_12 : f32 to vector<8x128xf32>
    %18 = arith.cmpf oge, %16, %17 : vector<8x128xf32>
    %cst_13 = arith.constant 0.00999999977 : f32
    %19 = vector.broadcast %cst_13 : f32 to vector<8x128xf32>
    %20 = arith.mulf %19, %16 : vector<8x128xf32>
    %21 = arith.select %18, %16, %20 : vector<8x128xi1>, vector<8x128xf32>
    %c0_14 = arith.constant 0 : index
    %c0_15 = arith.constant 0 : index
    %22 = vector.load %arg6[%c0_14, %c0_15] : memref<4x8xbf16, #tpu.memory_space<vmem>>, vector<4x8xbf16>
    %23 = arith.truncf %21 : vector<8x128xf32> to vector<8x128xbf16>
    %cst_16 = arith.constant dense<0.000000e+00> : vector<4x128xf32>
    %24 = tpu.matmul %22, %23, %cst_16 {dimension_numbers = #tpu.dot_dimension_numbers<[1], [0], [0], [1], [0, 0, 1, 1], [], []>} : vector<4x8xbf16>, vector<8x128xbf16>, vector<4x128xf32> -> vector<4x128xf32>
    %c0_17 = arith.constant 0 : index
    %c0_18 = arith.constant 0 : index
    %25 = vector.load %arg7[%c0_17, %c0_18] : memref<4x1xf32, #tpu.memory_space<vmem>>, vector<4x1xf32>
    %26 = vector.broadcast %25 : vector<4x1xf32> to vector<4x128xf32>
    %27 = arith.addf %24, %26 : vector<4x128xf32>
    %28 = arith.negf %27 : vector<4x128xf32>
    %29 = math.exp %28 : vector<4x128xf32>
    %cst_19 = arith.constant 1.000000e+00 : f32
    %30 = vector.broadcast %cst_19 : f32 to vector<4x128xf32>
    %31 = arith.addf %30, %29 : vector<4x128xf32>
    %32 = arith.divf %30, %31 : vector<4x128xf32>
    %33 = arith.truncf %32 : vector<4x128xf32> to vector<4x128xbf16>
    %c0_20 = arith.constant 0 : index
    %c0_21 = arith.constant 0 : index
    %34 = vector.load %arg8[%c0_20, %c0_21] : memref<4x128xbf16, #tpu.memory_space<vmem>>, vector<4x128xbf16>
    tpu.vector_store %arg8[%c0_20, %c0_21], %33 {strides = array<i32>} : memref<4x128xbf16, #tpu.memory_space<vmem>>, vector<4x128xbf16>,
    return
  }
  func.func @transform_0(%arg0: i32) -> (i32, i32) {
    %c0_i32 = arith.constant 0 : i32
    %c0_i32_0 = arith.constant 0 : i32
    return %c0_i32, %arg0 : i32, i32
  }
  func.func @transform_1(%arg0: i32) -> (i32, i32) {
    %c0_i32 = arith.constant 0 : i32
    %c0_i32_0 = arith.constant 0 : i32
    %c0_i32_1 = arith.constant 0 : i32
    return %c0_i32, %c0_i32_0 : i32, i32
  }
  func.func @transform_2(%arg0: i32) -> (i32, i32) {
    %c0_i32 = arith.constant 0 : i32
    %c0_i32_0 = arith.constant 0 : i32
    %c0_i32_1 = arith.constant 0 : i32
    return %c0_i32, %c0_i32_0 : i32, i32
  }
  func.func @transform_3(%arg0: i32) -> (i32, i32) {
    %c0_i32 = arith.constant 0 : i32
    %c0_i32_0 = arith.constant 0 : i32
    %c0_i32_1 = arith.constant 0 : i32
    return %c0_i32, %c0_i32_0 : i32, i32
  }
  func.func @transform_4(%arg0: i32) -> (i32, i32) {
    %c0_i32 = arith.constant 0 : i32
    %c0_i32_0 = arith.constant 0 : i32
    %c0_i32_1 = arith.constant 0 : i32
    return %c0_i32, %c0_i32_0 : i32, i32
  }
  func.func @transform_5(%arg0: i32) -> (i32, i32) {
    %c0_i32 = arith.constant 0 : i32
    %c0_i32_0 = arith.constant 0 : i32
    %c0_i32_1 = arith.constant 0 : i32
    return %c0_i32, %c0_i32_0 : i32, i32
  }
  func.func @transform_6(%arg0: i32) -> (i32, i32) {
    %c0_i32 = arith.constant 0 : i32
    %c0_i32_0 = arith.constant 0 : i32
    %c0_i32_1 = arith.constant 0 : i32
    return %c0_i32, %c0_i32_0 : i32, i32
  }
  func.func @transform_7(%arg0: i32) -> (i32, i32) {
    %c0_i32 = arith.constant 0 : i32
    %c0_i32_0 = arith.constant 0 : i32
    return %c0_i32, %arg0 : i32, i32
  }
}

</mosaic_0001>

<llo_original>
// kernel: mlp_forward.1
$region0: #{mlp_forward.1}
  #allocation0 [shape = 'u32[]', space=smem, size = 0x4, offset = 0x4, fixed_abs, tag = 'smem constant byte address 0x4 - core index']
  #allocation1 [shape = 'u32[72,128]{1,0:T(1,128)}', space=vmem, size = 0x9000, scoped, tag = 'internal scratch']
  %s0 = inlined_call_operand.vmem [shape: bf16[32,128], index: 0, kind: input, shape index: {}]
  %s1 = inlined_call_operand.vmem [shape: bf16[16,32], index: 1, kind: input, shape index: {}]
  %s2 = inlined_call_operand.vmem [shape: f32[16,1], index: 2, kind: input, shape index: {}]
  %s3 = inlined_call_operand.vmem [shape: bf16[8,16], index: 3, kind: input, shape index: {}]
  %s4 = inlined_call_operand.vmem [shape: f32[8,1], index: 4, kind: input, shape index: {}]
  %s5 = inlined_call_operand.vmem [shape: bf16[4,8], index: 5, kind: input, shape index: {}]
  %s6 = inlined_call_operand.vmem [shape: f32[4,1], index: 6, kind: input, shape index: {}]
  %s7 = inlined_call_operand.vmem [shape: bf16[4,128], index: 7, kind: output, shape index: {}]
  %s8 = sld [smem:[#allocation0]]
  $region38: #{mlp_forward.1} parent=0
    _
  %s10 = ssub.s32 1, %s8
  %s11 = scalar_select 0, %s10, %s8
  // Predicated region
  $region2: #{mlp_forward.1} parent=0 // pred_check
    _
  $region3: #{mlp_forward.1} parent=0 // pred_check_branch
    %13 = sbr.rel (0) target = $region5
  $region4: #{mlp_forward.1} parent=0 // pred_region
    _
  $region5: #{mlp_forward.1} parent=0 // pred_fallthru
    _
  // Predicated region
  $region6: #{mlp_forward.1} parent=0 // pred_check
    _
  $region7: #{mlp_forward.1} parent=0 // pred_check_branch
    %15 = sbr.rel (0) target = $region9
  $region8: #{mlp_forward.1} parent=0 // pred_region
    _
  $region9: #{mlp_forward.1} parent=0 // pred_fallthru
    _
  // Predicated region
  $region10: #{mlp_forward.1} parent=0 // pred_check
    _
  $region11: #{mlp_forward.1} parent=0 // pred_check_branch
    %17 = sbr.rel (0) target = $region13
  $region12: #{mlp_forward.1} parent=0 // pred_region
    _
  $region13: #{mlp_forward.1} parent=0 // pred_fallthru
    _
  // Predicated region
  $region14: #{mlp_forward.1} parent=0 // pred_check
    _
  $region15: #{mlp_forward.1} parent=0 // pred_check_branch
    %19 = sbr.rel (0) target = $region17
  $region16: #{mlp_forward.1} parent=0 // pred_region
    _
  $region17: #{mlp_forward.1} parent=0 // pred_fallthru
    _
  // Predicated region
  $region18: #{mlp_forward.1} parent=0 // pred_check
    _
  $region19: #{mlp_forward.1} parent=0 // pred_check_branch
    %21 = sbr.rel (0) target = $region21
  $region20: #{mlp_forward.1} parent=0 // pred_region
    _
  $region21: #{mlp_forward.1} parent=0 // pred_fallthru
    _
  // Predicated region
  $region22: #{mlp_forward.1} parent=0 // pred_check
    _
  $region23: #{mlp_forward.1} parent=0 // pred_check_branch
    %23 = sbr.rel (0) target = $region25
  $region24: #{mlp_forward.1} parent=0 // pred_region
    _
  $region25: #{mlp_forward.1} parent=0 // pred_fallthru
    _
  // Predicated region
  $region26: #{mlp_forward.1} parent=0 // pred_check
    _
  $region27: #{mlp_forward.1} parent=0 // pred_check_branch
    %25 = sbr.rel (0) target = $region29
  $region28: #{mlp_forward.1} parent=0 // pred_region
    _
  $region29: #{mlp_forward.1} parent=0 // pred_fallthru
    _
  %v27 = vld [vmem:[%s1] sm:$0xf]
  %v28 = vld [vmem:[%s1 + $0x4] sm:$0xf]
  %v29 = vld [vmem:[%s0] sm:$0xf]
  %v30 = vld [vmem:[%s0 + $0x4] sm:$0xf]
  %v31 = vld [vmem:[%s0 + $0x8] sm:$0xf]
  %v32 = vld [vmem:[%s0 + $0xc] sm:$0xf]
  %v33 = vld [vmem:[%s2] sm:$0xff]
  %v34 = vld [vmem:[%s2 + $0x8] sm:$0xff]
  %36 = vset.pattern.permute.xlu0 0
  %37 = vperm.xlu0 %36, %v33
  %v38 = vpop.permute.xlu0 %37
  %41 = vset.pattern.permute.xlu0 0
  %42 = vperm.xlu0 %41, %v34
  %v43 = vpop.permute.xlu0 %42
  %v47 = vunpack.c.l.b16 %v27
  %v48 = vunpack.c.l.b16 %v28
  %v49 = vpack.c.b16 %v48, %v47
  %v54 = vunpack.c.l.b16 %v29
  %v55 = vunpack.c.l.b16 %v30
  %v56 = vunpack.c.l.b16 %v31
  %v57 = vunpack.c.l.b16 %v32
  %v58 = vpack.c.b16 %v55, %v54
  %v59 = vpack.c.b16 %v57, %v56
  %vm62 = vcmask 261120
  %v64 = vsel %vm62, %v49, 0
  %66 = vmatpush.bf16.msra.mxu0 0
  %67 = vmatpush.bf16.msra.mxu0 0
  %68 = vmatpush.bf16.msra.mxu0 0
  %69 = vmatpush.bf16.msra.mxu0 0
  %70 = vmatpush.bf16.msra.mxu0 0
  %71 = vmatpush.bf16.msra.mxu0 0
  %72 = vmatpush.bf16.msra.mxu0 %v59
  %73 = vmatpush.bf16.msra.mxu0 %v58
  %74 = vmatmul.bf16.gmra.mxu0 %v64
  %v75 = vpop.f32.mrf.mxu0
  %v76 = vadd.f32 %v38, %v75
  %v77 = vpop.f32.mrf.mxu0
  %v78 = vadd.f32 %v43, %v77
  %79 = vdwg.mxu0
  %vm80 = vcmp.ge.f32.partialorder %v76, 0.0
  %vm81 = vcmp.ge.f32.partialorder %v78, 0.0
  %v82 = vmul.f32 %v76, 0.01
  %v83 = vmul.f32 %v78, 0.01
  %v84 = vsel %vm80, %v76, %v82
  %v85 = vsel %vm81, %v78, %v83
  %v86 = vld [vmem:[%s3] sm:$0xf]
  %v87 = vpack.c.bf16 %v85, %v84
  %v88 = vld [vmem:[%s4] sm:$0xff]
  %90 = vset.pattern.permute.xlu0 0
  %91 = vperm.xlu0 %90, %v88
  %v92 = vpop.permute.xlu0 %91
  %vm94 = vcmask 130048
  %v96 = vsel %vm94, %v86, 0
  %98 = vmatpush.bf16.msra.mxu0 0
  %99 = vmatpush.bf16.msra.mxu0 0
  %100 = vmatpush.bf16.msra.mxu0 0
  %101 = vmatpush.bf16.msra.mxu0 0
  %102 = vmatpush.bf16.msra.mxu0 0
  %103 = vmatpush.bf16.msra.mxu0 0
  %104 = vmatpush.bf16.msra.mxu0 0
  %105 = vmatpush.bf16.msra.mxu0 %v87
  %106 = vmatmul.bf16.gmra.mxu0 %v96
  %v107 = vpop.f32.mrf.mxu0
  %v108 = vadd.f32 %v92, %v107
  %v109 = vpop.f32.mrf.mxu0
  %110 = vdwg.mxu0
  %vm111 = vcmp.ge.f32.partialorder %v108, 0.0
  %v112 = vmul.f32 %v108, 0.01
  %v113 = vsel %vm111, %v108, %v112
  %v114 = vld [vmem:[%s5] sm:$0x3]
  %v115 = vpack.c.bf16 %v113, %v113
  %v116 = vld [vmem:[%s6] sm:$0xf]
  %118 = vset.pattern.permute.xlu0 0
  %119 = vperm.xlu0 %118, %v116
  %v120 = vpop.permute.xlu0 %119
  %vm122 = vcmask 64512
  %v124 = vsel %vm122, %v114, 0
  %vm126 = vcmask 1043456
  %v128 = vsel %vm126, %v115, 0
  %130 = vmatpush.bf16.msra.mxu0 0
  %131 = vmatpush.bf16.msra.mxu0 0
  %132 = vmatpush.bf16.msra.mxu0 0
  %133 = vmatpush.bf16.msra.mxu0 0
  %134 = vmatpush.bf16.msra.mxu0 0
  %135 = vmatpush.bf16.msra.mxu0 0
  %136 = vmatpush.bf16.msra.mxu0 0
  %137 = vmatpush.bf16.msra.mxu0 %v128
  %138 = vmatmul.bf16.gmra.mxu0 %v124
  %v139 = vpop.f32.mrf.mxu0
  %v140 = vadd.f32 %v120, %v139
  %v141 = vpop.f32.mrf.mxu0
  %142 = vdwg.mxu0
  %v143 = vxor.u32 %v140, 2147483648
  %v144 = vmul.f32 %v143, 1.442695
  %v145 = vpow.pop %v144
  %v146 = vadd.f32 %v145, 1.0
  %v147 = vrcp.pop %v146
  %v148 = vmul.f32 %v146, %v147
  %v149 = vsub.f32 1.0, %v148
  %v150 = vmul.f32 %v147, %v149
  %v151 = vadd.f32 %v147, %v150
  %vm152 = vweird.f32 %v146
  %vm153 = vweird.f32 %v147
  %vm154 = vmor %vm152, %vm153
  %v155 = vsel %vm154, %v147, %v151
  %v156 = vand.u32 2147483647, %v146
  %vm157 = vcmp.eq.f32.partialorder %v156, 8.507059e+37
  %v158 = vand.u32 %v146, 2147483648
  %v159 = vor.u32 1.1754944e-38, %v158
  %v160 = vsel %vm157, %v159, %v155
  %v161 = vmul.f32 1.0, %v160
  %v162 = vpack.c.bf16 %v161, %v161
  %163 = vst [vmem:[%s7] sm:$0x3] %v162
  // Predicated region
  $region30: #{mlp_forward.1} parent=0 // pred_check
    _
  $region31: #{mlp_forward.1} parent=0 // pred_check_branch
    %165 = sbr.rel (0) target = $region33
  $region32: #{mlp_forward.1} parent=0 // pred_region
    _
  $region33: #{mlp_forward.1} parent=0 // pred_fallthru
    _
  // Predicated region
  $region34: #{mlp_forward.1} parent=0 // pred_check
    _
  $region35: #{mlp_forward.1} parent=0 // pred_check_branch
    %167 = sbr.rel (0) target = $region37
  $region36: #{mlp_forward.1} parent=0 // pred_region
    _
  $region37: #{mlp_forward.1} parent=0 // pred_fallthru
    _

</llo_original>
